<compile_context>
chip_gen: v7x
topology: tpu7x:2x2x1
jax: 0.10.0
libtpu: 0.0.40
codegen_flags: <defaults>
</compile_context>

<pallas_src>
import functools

import jax
import jax.numpy as jnp
from jax import lax
from jax.experimental import pallas as pl
from jax.experimental.pallas import tpu as pltpu


# ---------------------------------------------------------------------------
# Device helpers (generation-aware budgets)
# ---------------------------------------------------------------------------
def _tpu_vmem_capacity_bytes():
    try:
        return int(pltpu.get_tpu_info().vmem_capacity_bytes)
    except Exception:
        return 128 << 20  # v5e / v6e default


def _supports_native_bf16_vpu():
    """bf16 VPU datapath exists on v6e/v7x; keep f32 math on v5e and older."""
    try:
        kind = jax.devices()[0].device_kind.lower()
    except Exception:
        return False
    old = ("v2", "v3", "v4", "v5 lite", "v5lite", "v5e")
    return not any(tag in kind for tag in old)


def _pick_batch_tile(b, per_batch_bytes, max_block_bytes):
    """Largest divisor TB of B fitting the budget, keeping >= 2 grid steps
    whenever B >= 2 (feeds both v7x TensorCores / megacore)."""
    best = 1
    for tb in range(1, b + 1):
        if b % tb != 0:
            continue
        if tb * per_batch_bytes > max_block_bytes:
            break
        if b >= 2 and b // tb < 2:
            break
        best = tb
    return best


# ---------------------------------------------------------------------------
# Kernels
# ---------------------------------------------------------------------------
def _fused_kernel(x_ref, w1_ref, b1_ref, w2_ref, b2_ref, o_ref, *,
                  inv_hw, compute_dtype):
    """Single-pass CBAM channel attention for a (TB, C, HW) block.

    w1 (Hid, C), b1 (Hid, 1), w2 (C, Hid), b2 (C, 1).  Column-form MLP so the
    shared MLP runs once on a (C, 2*TB) operand (avg columns, then max).
    """
    tb = x_ref.shape[0]

    # Global avg / max pools with f32 accumulation, one batch element at a
    # time -> no full-block f32 temporary stays live across the MLP.
    avg_cols, max_cols = [], []
    for i in range(tb):
        xi = x_ref[i]                                                # (C, HW)
        avg_cols.append(
            jnp.sum(xi, axis=1, keepdims=True, dtype=jnp.float32) * inv_hw)
        max_cols.append(
            jnp.max(xi, axis=1, keepdims=True).astype(jnp.float32))
    p = jnp.concatenate(avg_cols + max_cols, axis=1)                 # (C, 2*TB)

    h = jnp.dot(w1_ref[...], p, preferred_element_type=jnp.float32) + b1_ref[...]
    h = jnp.maximum(h, 0.0)                                          # (Hid, 2*TB)
    logits = jnp.dot(w2_ref[...], h, preferred_element_type=jnp.float32) + b2_ref[...]
    scale = jax.nn.sigmoid(logits[:, :tb] + logits[:, tb:])          # (C, TB)

    # Re-read the input ref for the scaling multiply (perf feedback: do not
    # keep a widened copy of the block live across pooling + MLP).
    for i in range(tb):
        s = scale[:, i:i + 1].astype(compute_dtype)                  # (C, 1)
        o_ref[i] = (x_ref[i].astype(compute_dtype) * s).astype(o_ref.dtype)


def _pool_kernel(x_ref, pooled_ref, sum_sc, max_sc, *, hw, inv_hw):
    """Pass 1 of the tiled path: accumulate avg/max over lane-dense HW tiles.

    grid = (B, n_hw_tiles); the HW-tile axis is the innermost ("arbitrary")
    reduction axis.  Ragged last tile is masked in-kernel.
    """
    t = pl.program_id(1)
    thw = x_ref.shape[-1]

    @pl.when(t == 0)
    def _():
        sum_sc[...] = jnp.zeros_like(sum_sc)
        max_sc[...] = jnp.full_like(max_sc, -jnp.inf)

    xb = x_ref[0]                                                    # (C, thw)
    if hw % thw != 0:
        lane = lax.broadcasted_iota(jnp.int32, xb.shape, 1)
        valid = (t * thw + lane) < hw
        xf = xb.astype(jnp.float32)
        tile_sum = jnp.sum(jnp.where(valid, xf, 0.0), axis=1, keepdims=True)
        tile_max = jnp.max(jnp.where(valid, xf, -jnp.inf), axis=1, keepdims=True)
    else:
        tile_sum = jnp.sum(xb, axis=1, keepdims=True, dtype=jnp.float32)
        tile_max = jnp.max(xb, axis=1, keepdims=True).astype(jnp.float32)
    sum_sc[...] += tile_sum
    max_sc[...] = jnp.maximum(max_sc[...], tile_max)

    @pl.when(t == pl.num_programs(1) - 1)
    def _():
        pooled_ref[0] = jnp.concatenate([sum_sc[...] * inv_hw, max_sc[...]],
                                        axis=1)                      # (C, 2)


def _scale_kernel(x_ref, scale_ref, o_ref, *, compute_dtype):
    """Pass 2 of the tiled path: lane-dense (1, C, thw) * (1, C, 1)."""
    s = scale_ref[0].astype(compute_dtype)                           # (C, 1)
    o_ref[0] = (x_ref[0].astype(compute_dtype) * s).astype(o_ref.dtype)


# ---------------------------------------------------------------------------
# Wrapper
# ---------------------------------------------------------------------------
def channel_attention(x_nchw, w1, b1, w2, b2, *, max_block_bytes=None):
    """CBAM channel attention forward.

    x_nchw: (B, C, H, W).  PyTorch nn.Linear parameters:
      w1 (Hid, C), b1 (Hid,), w2 (C, Hid), b2 (C,).
    Returns an array with the same shape and dtype as x_nchw.
    """
    B, C, H, W = x_nchw.shape
    HW = H * W
    hid = w1.shape[0]
    in_dt = x_nchw.dtype
    itemsize = jnp.dtype(in_dt).itemsize

    # Generation-aware budgets (v5e/v6e: 128 MiB VMEM; v7x: 64 MiB per TC).
    vmem_cap = _tpu_vmem_capacity_bytes()
    vmem_limit_cap = int(min(vmem_cap - (12 << 20), 100 << 20))      # ~52 MiB on v7x
    if max_block_bytes is None:
        # fused footprint ~= 2x in + 2x out + ~1x temporaries  => cap/8 blocks
        max_block_bytes = vmem_cap // 8

    native_mul = (in_dt == jnp.bfloat16) and _supports_native_bf16_vpu()
    compute_dt = in_dt if native_mul else jnp.float32

    x = x_nchw.reshape(B, C, HW)                  # free reshape, no transpose
    w1f = w1.astype(jnp.float32)                  # (Hid, C)
    w2f = w2.astype(jnp.float32)                  # (C, Hid)
    b1f = b1.astype(jnp.float32)
    b2f = b2.astype(jnp.float32)
    b1c = b1f.reshape(hid, 1)                     # column biases: y = W @ p + b
    b2c = b2f.reshape(C, 1)
    weight_bytes = 4 * (hid * C + hid + C * hid + C)

    per_batch_bytes = C * HW * itemsize

    if per_batch_bytes <= max_block_bytes:
        # ------------- fused single-pass path (reads x from HBM once) -------
        tb = _pick_batch_tile(B, per_batch_bytes, max_block_bytes)
        nb = B // tb
        block_bytes = tb * per_batch_bytes
        vmem_limit = int(min(
            vmem_limit_cap,
            max(16 << 20,
                4 * block_bytes + C * HW * 4 + 2 * weight_bytes + (2 << 20))))
        cost = pl.CostEstimate(
            flops=int(B * (3 * C * HW + 8 * C * hid)),
            transcendentals=int(B * C),
            bytes_accessed=int(2 * B * C * HW * itemsize + weight_bytes))
        out = pl.pallas_call(
            functools.partial(_fused_kernel, inv_hw=1.0 / HW,
                              compute_dtype=compute_dt),
            out_shape=jax.ShapeDtypeStruct((B, C, HW), in_dt),
            grid_spec=pltpu.PrefetchScalarGridSpec(
                num_scalar_prefetch=0,
                grid=(nb,),
                in_specs=[
                    pl.BlockSpec((tb, C, HW), lambda i: (i, 0, 0)),
                    pl.BlockSpec((hid, C), lambda i: (0, 0)),
                    pl.BlockSpec((hid, 1), lambda i: (0, 0)),
                    pl.BlockSpec((C, hid), lambda i: (0, 0)),
                    pl.BlockSpec((C, 1), lambda i: (0, 0)),
                ],
                out_specs=pl.BlockSpec((tb, C, HW), lambda i: (i, 0, 0)),
            ),
            compiler_params=pltpu.CompilerParams(
                dimension_semantics=("parallel",),
                vmem_limit_bytes=vmem_limit),
            cost_estimate=cost,
        )(x, w1f, b1c, w2f, b2c)
        return out.reshape(B, C, H, W)

    # ------------- two-pass HW-tiled path (bounded VMEM, huge maps) ---------
    # Lane-dense tile: largest multiple of 128 fitting the per-block budget.
    thw = max(128, (max_block_bytes // (C * itemsize)) // 128 * 128)
    thw = min(thw, ((HW + 127) // 128) * 128)
    nt = pl.cdiv(HW, thw)
    block_bytes = C * thw * itemsize

    # Pass 1: pooled avg/max per (b, c) -> (B, C, 2) in f32.
    vmem1 = int(min(vmem_limit_cap, max(16 << 20, 3 * block_bytes + (2 << 20))))
    cost1 = pl.CostEstimate(
        flops=int(2 * B * C * HW), transcendentals=0,
        bytes_accessed=int(B * C * HW * itemsize + B * C * 2 * 4))
    pooled = pl.pallas_call(
        functools.partial(_pool_kernel, hw=HW, inv_hw=1.0 / HW),
        out_shape=jax.ShapeDtypeStruct((B, C, 2), jnp.float32),
        grid_spec=pltpu.PrefetchScalarGridSpec(
            num_scalar_prefetch=0,
            grid=(B, nt),
            in_specs=[pl.BlockSpec((1, C, thw), lambda b, t: (b, 0, t))],
            out_specs=pl.BlockSpec((1, C, 2), lambda b, t: (b, 0, 0)),
            scratch_shapes=[pltpu.VMEM((C, 1), jnp.float32),
                            pltpu.VMEM((C, 1), jnp.float32)],
        ),
        compiler_params=pltpu.CompilerParams(
            dimension_semantics=("parallel", "arbitrary"),
            vmem_limit_bytes=vmem1),
        cost_estimate=cost1,
    )(x)

    # Shared MLP + sigmoid on the tiny pooled tensor, hoisted out of the
    # DMA-bound streaming loop (perf feedback); plain JAX handles (B, C) fine.
    def mlp(p):
        hh = jnp.maximum(p @ w1f.T + b1f, 0.0)
        return hh @ w2f.T + b2f
    scale = jax.nn.sigmoid(mlp(pooled[:, :, 0]) + mlp(pooled[:, :, 1]))
    scale = scale[:, :, None].astype(jnp.float32)                    # (B, C, 1)

    # Pass 2: fully parallel lane-dense scaling (B x nt grid units keeps both
    # v7x TensorCores busy even for B == 1).
    vmem2 = int(min(vmem_limit_cap, max(16 << 20, 5 * block_bytes + (2 << 20))))
    cost2 = pl.CostEstimate(
        flops=int(B * C * HW), transcendentals=0,
        bytes_accessed=int(2 * B * C * HW * itemsize + B * C * 4))
    out = pl.pallas_call(
        functools.partial(_scale_kernel, compute_dtype=compute_dt),
        out_shape=jax.ShapeDtypeStruct((B, C, HW), in_dt),
        grid_spec=pltpu.PrefetchScalarGridSpec(
            num_scalar_prefetch=0,
            grid=(B, nt),
            in_specs=[
                pl.BlockSpec((1, C, thw), lambda b, t: (b, 0, t)),
                pl.BlockSpec((1, C, 1), lambda b, t: (b, 0, 0)),
            ],
            out_specs=pl.BlockSpec((1, C, thw), lambda b, t: (b, 0, t)),
        ),
        compiler_params=pltpu.CompilerParams(
            dimension_semantics=("parallel", "parallel"),
            vmem_limit_bytes=vmem2),
        cost_estimate=cost2,
    )(x, scale)
    return out.reshape(B, C, H, W)


# ---------------------------------------------------------------------------
# Pure-JAX reference (matches the PyTorch forward exactly)
# ---------------------------------------------------------------------------
def channel_attention_ref(x_nchw, w1, b1, w2, b2):
    xf = x_nchw.astype(jnp.float32)
    avg = jnp.mean(xf, axis=(2, 3))                   # (B, C)
    mx = jnp.max(xf, axis=(2, 3))                     # (B, C)

    def mlp(p):
        h = jnp.maximum(p @ w1.T + b1, 0.0)
        return h @ w2.T + b2

    scale = jax.nn.sigmoid(mlp(avg) + mlp(mx))        # (B, C)
    return (xf * scale[:, :, None, None]).astype(x_nchw.dtype)


if __name__ == "__main__":
    key = jax.random.PRNGKey(0)

    def make_case(b, c, h, w, reduction=16):
        hid = max(1, c // reduction)
        ks = jax.random.split(key, 5)
        x = jax.random.normal(ks[0], (b, c, h, w), dtype=jnp.float32)
        w1 = 0.1 * jax.random.normal(ks[1], (hid, c), dtype=jnp.float32)
        b1 = 0.1 * jax.random.normal(ks[2], (hid,), dtype=jnp.float32)
        w2 = 0.1 * jax.random.normal(ks[3], (c, hid), dtype=jnp.float32)
        b2 = 0.1 * jax.random.normal(ks[4], (c,), dtype=jnp.float32)
        return x, w1, b1, w2, b2

    # 1) Default fused single-pass path (small map, one batch per grid step).
    x, w1, b1, w2, b2 = make_case(2, 32, 16, 16)
    out = jax.block_until_ready(channel_attention(x, w1, b1, w2, b2))
    ref = channel_attention_ref(x, w1, b1, w2, b2)
    assert out.shape == x.shape
    assert jnp.allclose(out, ref, atol=1e-5, rtol=1e-5), "fused path mismatch"

    # 2) Fused path with multi-batch blocks (TB > 1) -> batched shared MLP.
    x, w1, b1, w2, b2 = make_case(8, 64, 16, 16)
    out = jax.block_until_ready(channel_attention(x, w1, b1, w2, b2))
    ref = channel_attention_ref(x, w1, b1, w2, b2)
    assert jnp.allclose(out, ref, atol=1e-5, rtol=1e-5), "batched fused mismatch"

    # 3) Forced two-pass HW-tiled path with a ragged (masked) last tile.
    x, w1, b1, w2, b2 = make_case(2, 32, 12, 25)
    out = jax.block_until_ready(
        channel_attention(x, w1, b1, w2, b2, max_block_bytes=16 * 1024))
    ref = channel_attention_ref(x, w1, b1, w2, b2)
    assert jnp.allclose(out, ref, atol=1e-5, rtol=1e-5), "tiled path mismatch"

    print("KERNEL_OK")
</pallas_src>

<mosaic_0001>
module attributes {stable_mosaic.version = 11 : i64} {
  func.func @_fused_kernel(%arg0: i32, %arg1: memref<1x32x256xf32, #tpu.memory_space<vmem>>, %arg2: memref<2x32xf32, #tpu.memory_space<vmem>>, %arg3: memref<2x1xf32, #tpu.memory_space<vmem>>, %arg4: memref<32x2xf32, #tpu.memory_space<vmem>>, %arg5: memref<32x1xf32, #tpu.memory_space<vmem>>, %arg6: memref<1x32x256xf32, #tpu.memory_space<vmem>>) attributes {dimension_semantics = [#tpu.dimension_semantics<parallel>], iteration_bounds = array<i64: 2>, scalar_prefetch = 0 : i64, scratch_operands = 0 : i64, tpu.core_type = #tpu.core_type<tc>, window_params = [{transform_indices = @transform_0, window_bounds = array<i64: 1, 32, 256>}, {pipeline_mode = #tpu.pipeline_mode<synchronous>, transform_indices = @transform_1, window_bounds = array<i64: 2, 32>}, {pipeline_mode = #tpu.pipeline_mode<synchronous>, transform_indices = @transform_2, window_bounds = array<i64: 2, 1>}, {pipeline_mode = #tpu.pipeline_mode<synchronous>, transform_indices = @transform_3, window_bounds = array<i64: 32, 2>}, {pipeline_mode = #tpu.pipeline_mode<synchronous>, transform_indices = @transform_4, window_bounds = array<i64: 32, 1>}, {transform_indices = @transform_5, window_bounds = array<i64: 1, 32, 256>}]} {
    %c0 = arith.constant 0 : index
    %c0_0 = arith.constant 0 : index
    %c0_1 = arith.constant 0 : index
    %0 = vector.load %arg1[%c0, %c0_0, %c0_1] : memref<1x32x256xf32, #tpu.memory_space<vmem>>, vector<1x32x256xf32>
    %1 = vector.shape_cast %0 : vector<1x32x256xf32> to vector<32x256xf32>
    %cst = arith.constant dense<0.000000e+00> : vector<32xf32>
    %2 = vector.multi_reduction <add>, %1, %cst [1] : vector<32x256xf32> to vector<32xf32>
    %3 = vector.shape_cast %2 : vector<32xf32> to vector<32x1xf32>
    %cst_2 = arith.constant 3.906250e-03 : f32
    %4 = vector.broadcast %cst_2 : f32 to vector<32x1xf32>
    %5 = arith.mulf %3, %4 : vector<32x1xf32>
    %cst_3 = arith.constant dense<0xFF800000> : vector<32xf32>
    %6 = vector.multi_reduction <maximumf>, %1, %cst_3 [1] : vector<32x256xf32> to vector<32xf32>
    %7 = vector.shape_cast %6 : vector<32xf32> to vector<32x1xf32>
    %8 = tpu.concatenate %5, %7 in 1 : vector<32x1xf32>, vector<32x1xf32> -> vector<32x2xf32>
    %c0_4 = arith.constant 0 : index
    %c0_5 = arith.constant 0 : index
    %9 = vector.load %arg2[%c0_4, %c0_5] : memref<2x32xf32, #tpu.memory_space<vmem>>, vector<2x32xf32>
    %cst_6 = arith.constant dense<0.000000e+00> : vector<2x2xf32>
    %10 = tpu.matmul %9, %8, %cst_6 {dimension_numbers = #tpu.dot_dimension_numbers<[1], [0], [0], [1], [0, 0, 1, 1], [], []>} : vector<2x32xf32>, vector<32x2xf32>, vector<2x2xf32> -> vector<2x2xf32>
    %c0_7 = arith.constant 0 : index
    %c0_8 = arith.constant 0 : index
    %11 = vector.load %arg3[%c0_7, %c0_8] : memref<2x1xf32, #tpu.memory_space<vmem>>, vector<2x1xf32>
    %12 = vector.broadcast %11 : vector<2x1xf32> to vector<2x2xf32>
    %13 = arith.addf %10, %12 : vector<2x2xf32>
    %cst_9 = arith.constant 0.000000e+00 : f32
    %14 = vector.broadcast %cst_9 : f32 to vector<2x2xf32>
    %15 = arith.maximumf %13, %14 : vector<2x2xf32>
    %c0_10 = arith.constant 0 : index
    %c0_11 = arith.constant 0 : index
    %16 = vector.load %arg4[%c0_10, %c0_11] : memref<32x2xf32, #tpu.memory_space<vmem>>, vector<32x2xf32>
    %cst_12 = arith.constant dense<0.000000e+00> : vector<32x2xf32>
    %17 = tpu.matmul %16, %15, %cst_12 {dimension_numbers = #tpu.dot_dimension_numbers<[1], [0], [0], [1], [0, 0, 1, 1], [], []>} : vector<32x2xf32>, vector<2x2xf32>, vector<32x2xf32> -> vector<32x2xf32>
    %c0_13 = arith.constant 0 : index
    %c0_14 = arith.constant 0 : index
    %18 = vector.load %arg5[%c0_13, %c0_14] : memref<32x1xf32, #tpu.memory_space<vmem>>, vector<32x1xf32>
    %19 = vector.broadcast %18 : vector<32x1xf32> to vector<32x2xf32>
    %20 = arith.addf %17, %19 : vector<32x2xf32>
    %21 = vector.extract_strided_slice %20 {offsets = [0, 0], sizes = [32, 1], strides = [1, 1]} : vector<32x2xf32> to vector<32x1xf32>
    %22 = vector.extract_strided_slice %20 {offsets = [0, 1], sizes = [32, 1], strides = [1, 1]} : vector<32x2xf32> to vector<32x1xf32>
    %23 = arith.addf %21, %22 : vector<32x1xf32>
    %24 = arith.negf %23 : vector<32x1xf32>
    %25 = math.exp %24 : vector<32x1xf32>
    %cst_15 = arith.constant 1.000000e+00 : f32
    %26 = vector.broadcast %cst_15 : f32 to vector<32x1xf32>
    %27 = arith.addf %26, %25 : vector<32x1xf32>
    %28 = arith.divf %26, %27 : vector<32x1xf32>
    %c0_16 = arith.constant 0 : index
    %c0_17 = arith.constant 0 : index
    %c0_18 = arith.constant 0 : index
    %29 = vector.load %arg1[%c0_16, %c0_17, %c0_18] : memref<1x32x256xf32, #tpu.memory_space<vmem>>, vector<1x32x256xf32>
    %30 = vector.shape_cast %29 : vector<1x32x256xf32> to vector<32x256xf32>
    %31 = vector.broadcast %28 : vector<32x1xf32> to vector<32x256xf32>
    %32 = arith.mulf %30, %31 : vector<32x256xf32>
    %c0_19 = arith.constant 0 : index
    %c0_20 = arith.constant 0 : index
    %c0_21 = arith.constant 0 : index
    %33 = vector.load %arg6[%c0_19, %c0_20, %c0_21] : memref<1x32x256xf32, #tpu.memory_space<vmem>>, vector<1x32x256xf32>
    %34 = vector.shape_cast %33 : vector<1x32x256xf32> to vector<32x256xf32>
    %35 = vector.shape_cast %32 : vector<32x256xf32> to vector<1x32x256xf32>
    tpu.vector_store %arg6[%c0_19, %c0_20, %c0_21], %35 {strides = array<i32>} : memref<1x32x256xf32, #tpu.memory_space<vmem>>, vector<1x32x256xf32>,
    return
  }
  func.func @transform_0(%arg0: i32) -> (i32, i32, i32) {
    %c0_i32 = arith.constant 0 : i32
    %c0_i32_0 = arith.constant 0 : i32
    %c0_i32_1 = arith.constant 0 : i32
    return %arg0, %c0_i32, %c0_i32_0 : i32, i32, i32
  }
  func.func @transform_1(%arg0: i32) -> (i32, i32) {
    %c0_i32 = arith.constant 0 : i32
    %c0_i32_0 = arith.constant 0 : i32
    %c0_i32_1 = arith.constant 0 : i32
    return %c0_i32, %c0_i32_0 : i32, i32
  }
  func.func @transform_2(%arg0: i32) -> (i32, i32) {
    %c0_i32 = arith.constant 0 : i32
    %c0_i32_0 = arith.constant 0 : i32
    %c0_i32_1 = arith.constant 0 : i32
    return %c0_i32, %c0_i32_0 : i32, i32
  }
  func.func @transform_3(%arg0: i32) -> (i32, i32) {
    %c0_i32 = arith.constant 0 : i32
    %c0_i32_0 = arith.constant 0 : i32
    %c0_i32_1 = arith.constant 0 : i32
    return %c0_i32, %c0_i32_0 : i32, i32
  }
  func.func @transform_4(%arg0: i32) -> (i32, i32) {
    %c0_i32 = arith.constant 0 : i32
    %c0_i32_0 = arith.constant 0 : i32
    %c0_i32_1 = arith.constant 0 : i32
    return %c0_i32, %c0_i32_0 : i32, i32
  }
  func.func @transform_5(%arg0: i32) -> (i32, i32, i32) {
    %c0_i32 = arith.constant 0 : i32
    %c0_i32_0 = arith.constant 0 : i32
    %c0_i32_1 = arith.constant 0 : i32
    return %arg0, %c0_i32, %c0_i32_0 : i32, i32, i32
  }
}

</mosaic_0001>

<llo_original>
// kernel: tpu_custom_call.1
$region0: #{tpu_custom_call.1}
  #allocation0 [shape = 'u32[]', space=smem, size = 0x4, offset = 0x4, fixed_abs, tag = 'smem constant byte address 0x4 - core index']
  #allocation1 [shape = 'u32[144,128]{1,0:T(1,128)}', space=vmem, size = 0x12000, scoped, tag = 'internal scratch']
  %s0 = inlined_call_operand.hbm [shape: f32[2,32,256], index: 0, kind: input, shape index: {}]
  %s1 = inlined_call_operand.vmem [shape: f32[2,32], index: 1, kind: input, shape index: {}]
  %s2 = inlined_call_operand.vmem [shape: f32[2,1], index: 2, kind: input, shape index: {}]
  %s3 = inlined_call_operand.vmem [shape: f32[32,2], index: 3, kind: input, shape index: {}]
  %s4 = inlined_call_operand.vmem [shape: f32[32,1], index: 4, kind: input, shape index: {}]
  %s5 = inlined_call_operand.hbm [shape: f32[2,32,256], index: 5, kind: output, shape index: {}]
  %s6 = sld [smem:[#allocation0]]
  $region57: #{tpu_custom_call.1} parent=0
    _
  %s8 = ssub.s32 1, %s6
  %s9 = scalar_select 0, %s8, %s6
  $region1: #{tpu_custom_call.1} parent=0
    #allocation2 [shape = 'u8[65536]{0}', space=vmem, size = 0x10000, scoped, tag = 'input window, operand 0']
    #allocation3 [shape = 's32[2]{0}', space=sflag, size = 0x8, scoped, tag = 'scoped memory for tpu_custom_call.1']
    #allocation4 [shape = 's32[2]{0}', space=sflag, size = 0x8, scoped, tag = 'scoped memory for tpu_custom_call.1']
    #allocation5 [shape = 'u8[65536]{0}', space=vmem, size = 0x10000, scoped, tag = 'output window, operand 0']
    %10 = vsyncpa [#allocation3], 0
    %s11 = scalar_lea.sflag [#allocation3], 1
    %12 = vsyncpa %s11, 0
    %13 = vsyncpa [#allocation4], 0
    %s14 = scalar_lea.sflag [#allocation4], 1
    %15 = vsyncpa %s14, 0
    loop: start=0, step=1, limit=4
    $region2: #{tpu_custom_call.1} parent=1 // loop_pre_header
      _
    $region3: #{tpu_custom_call.1} parent=1 // loop_header
      %s17 = sphi 0, %s21
      %p18 = scmp.ge.s32.totalorder %s17, 4
      %s27 = sphi 0, %s29
      %s30 = sphi 0, %s27
      %s31 = sphi 0, %s30
      %s47 = sphi 0, %s31
      %s51 = sphi 0, %s51
      %s53 = sphi 0, %s51
      %s54 = sphi 0, %s53
      %s68 = sphi 0, %s54
      %s72 = sphi 0, %s72
      %s74 = sphi 0, %s72
      %s75 = sphi 0, %s74
      %s89 = sphi 0, %s75
      %s93 = sphi 0, %s93
      %s95 = sphi 0, %s93
      %s96 = sphi 0, %s95
      %s110 = sphi 0, %s96
      %s114 = sphi 0, %s114
      %s116 = sphi 0, %s114
      %s117 = sphi 0, %s116
      %s131 = sphi 0, %s117
      %s137 = sphi 0, %s139
      %s140 = sphi 0, %s137
      %s141 = sphi 0, %s140
      %s157 = sphi 0, %s141
    $region4: #{tpu_custom_call.1} parent=1 // loop_header_branch
      %20 = sbr.rel (%p18) target = $region8
    $region5: #{tpu_custom_call.1} parent=1 // loop_body
      %s22 = ssub.s32 %s17, 1
      %s23 = ssub.s32 %s17, 2
      %s24 = sadd.s32 %s17, 1
      %s25 = ssub.s32 %s17, %s24
      %p26 = scmp.eq.s32.totalorder %s25, 0
      %s28 = sadd.s32 %s27, 1
      %s29 = scalar_select %p26, %s27, %s28
      %p32 = pneg %p26
      %p33 = scmp.eq.s32.totalorder %s17, 1
      %p34 = por %p32, %p33
      %p35 = scmp.ne.s32.totalorder %s27, %s30
      %p36 = scmp.eq.s32.totalorder %s17, 0
      %p37 = por %p35, %p36
      %p38 = scmp.ne.s32.totalorder %s27, %s30
      %p39 = scmp.eq.s32.totalorder %s22, 1
      %p40 = por %p38, %p39
      %p41 = scmp.ne.s32.totalorder %s30, %s31
      %p42 = scmp.eq.s32.totalorder %s22, 0
      %p43 = por %p41, %p42
      %p44 = scmp.ne.s32.totalorder %s30, %s31
      %p45 = scmp.eq.s32.totalorder %s23, 1
      %p46 = por %p44, %p45
      %p48 = scmp.ne.s32.totalorder %s31, %s47
      %p49 = scmp.eq.s32.totalorder %s23, 0
      %p50 = por %p48, %p49
      %s52 = sadd.s32 %s51, 1
      %p55 = scmp.eq.s32.totalorder %s17, 1
      %p56 = scmp.ne.s32.totalorder %s51, %s53
      %p57 = scmp.eq.s32.totalorder %s17, 0
      %p58 = por %p56, %p57
      %p59 = scmp.ne.s32.totalorder %s51, %s53
      %p60 = scmp.eq.s32.totalorder %s22, 1
      %p61 = por %p59, %p60
      %p62 = scmp.ne.s32.totalorder %s53, %s54
      %p63 = scmp.eq.s32.totalorder %s22, 0
      %p64 = por %p62, %p63
      %p65 = scmp.ne.s32.totalorder %s53, %s54
      %p66 = scmp.eq.s32.totalorder %s23, 1
      %p67 = por %p65, %p66
      %p69 = scmp.ne.s32.totalorder %s54, %s68
      %p70 = scmp.eq.s32.totalorder %s23, 0
      %p71 = por %p69, %p70
      %s73 = sadd.s32 %s72, 1
      %p76 = scmp.eq.s32.totalorder %s17, 1
      %p77 = scmp.ne.s32.totalorder %s72, %s74
      %p78 = scmp.eq.s32.totalorder %s17, 0
      %p79 = por %p77, %p78
      %p80 = scmp.ne.s32.totalorder %s72, %s74
      %p81 = scmp.eq.s32.totalorder %s22, 1
      %p82 = por %p80, %p81
      %p83 = scmp.ne.s32.totalorder %s74, %s75
      %p84 = scmp.eq.s32.totalorder %s22, 0
      %p85 = por %p83, %p84
      %p86 = scmp.ne.s32.totalorder %s74, %s75
      %p87 = scmp.eq.s32.totalorder %s23, 1
      %p88 = por %p86, %p87
      %p90 = scmp.ne.s32.totalorder %s75, %s89
      %p91 = scmp.eq.s32.totalorder %s23, 0
      %p92 = por %p90, %p91
      %s94 = sadd.s32 %s93, 1
      %p97 = scmp.eq.s32.totalorder %s17, 1
      %p98 = scmp.ne.s32.totalorder %s93, %s95
      %p99 = scmp.eq.s32.totalorder %s17, 0
      %p100 = por %p98, %p99
      %p101 = scmp.ne.s32.totalorder %s93, %s95
      %p102 = scmp.eq.s32.totalorder %s22, 1
      %p103 = por %p101, %p102
      %p104 = scmp.ne.s32.totalorder %s95, %s96
      %p105 = scmp.eq.s32.totalorder %s22, 0
      %p106 = por %p104, %p105
      %p107 = scmp.ne.s32.totalorder %s95, %s96
      %p108 = scmp.eq.s32.totalorder %s23, 1
      %p109 = por %p107, %p108
      %p111 = scmp.ne.s32.totalorder %s96, %s110
      %p112 = scmp.eq.s32.totalorder %s23, 0
      %p113 = por %p111, %p112
      %s115 = sadd.s32 %s114, 1
      %p118 = scmp.eq.s32.totalorder %s17, 1
      %p119 = scmp.ne.s32.totalorder %s114, %s116
      %p120 = scmp.eq.s32.totalorder %s17, 0
      %p121 = por %p119, %p120
      %p122 = scmp.ne.s32.totalorder %s114, %s116
      %p123 = scmp.eq.s32.totalorder %s22, 1
      %p124 = por %p122, %p123
      %p125 = scmp.ne.s32.totalorder %s116, %s117
      %p126 = scmp.eq.s32.totalorder %s22, 0
      %p127 = por %p125, %p126
      %p128 = scmp.ne.s32.totalorder %s116, %s117
      %p129 = scmp.eq.s32.totalorder %s23, 1
      %p130 = por %p128, %p129
      %p132 = scmp.ne.s32.totalorder %s117, %s131
      %p133 = scmp.eq.s32.totalorder %s23, 0
      %p134 = por %p132, %p133
      %s135 = ssub.s32 %s17, %s24
      %p136 = scmp.eq.s32.totalorder %s135, 0
      %s138 = sadd.s32 %s137, 1
      %s139 = scalar_select %p136, %s137, %s138
      %p142 = pneg %p136
      %p143 = scmp.eq.s32.totalorder %s17, 1
      %p144 = por %p142, %p143
      %p145 = scmp.ne.s32.totalorder %s137, %s140
      %p146 = scmp.eq.s32.totalorder %s17, 0
      %p147 = por %p145, %p146
      %p148 = scmp.ne.s32.totalorder %s137, %s140
      %p149 = scmp.eq.s32.totalorder %s22, 1
      %p150 = por %p148, %p149
      %p151 = scmp.ne.s32.totalorder %s140, %s141
      %p152 = scmp.eq.s32.totalorder %s22, 0
      %p153 = por %p151, %p152
      %p154 = scmp.ne.s32.totalorder %s140, %s141
      %p155 = scmp.eq.s32.totalorder %s23, 1
      %p156 = por %p154, %p155
      %p158 = scmp.ne.s32.totalorder %s141, %s157
      %p159 = scmp.eq.s32.totalorder %s23, 0
      %p160 = por %p158, %p159
      %p161 = scmp.le.s32.totalorder 1, %s17
      %p162 = scmp.lt.s32.totalorder %s17, 3
      %p163 = pnand %p161, %p162
      %p164 = pneg %p163
      // Predicated region
      $region9: #{tpu_custom_call.1} parent=5 // pred_check
        _
      $region10: #{tpu_custom_call.1} parent=5 // pred_check_branch
        %166 = sbr.rel (%p163) target = $region12
      $region11: #{tpu_custom_call.1} parent=5 // pred_region
        %s167 = ssub.s32 %s17, 1
        // Predicated region
        $region13: #{tpu_custom_call.1} parent=11 // pred_check
          %p168 = pneg %p64
        $region14: #{tpu_custom_call.1} parent=11 // pred_check_branch
          %170 = sbr.rel (%p168) target = $region16
        $region15: #{tpu_custom_call.1} parent=11 // pred_region
          _
        $region16: #{tpu_custom_call.1} parent=11 // pred_fallthru
          _
        // Predicated region
        $region17: #{tpu_custom_call.1} parent=11 // pred_check
          %p171 = pneg %p85
        $region18: #{tpu_custom_call.1} parent=11 // pred_check_branch
          %173 = sbr.rel (%p171) target = $region20
        $region19: #{tpu_custom_call.1} parent=11 // pred_region
          _
        $region20: #{tpu_custom_call.1} parent=11 // pred_fallthru
          _
        // Predicated region
        $region21: #{tpu_custom_call.1} parent=11 // pred_check
          %p174 = pneg %p106
        $region22: #{tpu_custom_call.1} parent=11 // pred_check_branch
          %176 = sbr.rel (%p174) target = $region24
        $region23: #{tpu_custom_call.1} parent=11 // pred_region
          _
        $region24: #{tpu_custom_call.1} parent=11 // pred_fallthru
          _
        // Predicated region
        $region25: #{tpu_custom_call.1} parent=11 // pred_check
          %p177 = pneg %p127
        $region26: #{tpu_custom_call.1} parent=11 // pred_check_branch
          %179 = sbr.rel (%p177) target = $region28
        $region27: #{tpu_custom_call.1} parent=11 // pred_region
          _
        $region28: #{tpu_custom_call.1} parent=11 // pred_fallthru
          _
      $region12: #{tpu_custom_call.1} parent=5 // pred_fallthru
        _
      %p180 = scmp.lt.s32.totalorder %s17, 2
      // Predicated region
      $region29: #{tpu_custom_call.1} parent=5 // pred_check
        %p181 = pneg %p180
      $region30: #{tpu_custom_call.1} parent=5 // pred_check_branch
        %183 = sbr.rel (%p181) target = $region32
      $region31: #{tpu_custom_call.1} parent=5 // pred_region
        // Predicated region
        $region33: #{tpu_custom_call.1} parent=31 // pred_check
          %p184 = pneg %p37
        $region34: #{tpu_custom_call.1} parent=31 // pred_check_branch
          %186 = sbr.rel (%p184) target = $region36
        $region35: #{tpu_custom_call.1} parent=31 // pred_region
          %s187 = sand.u32 %s27, 1
          %s188 = scalar_lea.sflag [#allocation3], %s187
          %s189 = sand.u32 %s27, 1
          %s190 = smul.addr %s189, 64
          %s191 = scalar_lea.vmem [#allocation2], %s190
          %s193 = ssub.s32 1024, 1024
          %194 = vsyncadd %s188, %s193
          %s195 = smul.addr %s17, 8
          %s196 = smul.addr %s195, 128
          %s197 = scalar_lea.hbm %s0, %s196
          %s198 = sshll.u32 %s191, 4
          %s199 = int_to_ptr.vmem [resolvable:$true] %s198
          %204 = dma.hbm_to_vmem [thread:$0]  %s197, 1024, %s199, %s188, 256, 256, 16
        $region36: #{tpu_custom_call.1} parent=31 // pred_fallthru
          _
      $region32: #{tpu_custom_call.1} parent=5 // pred_fallthru
        _
      %p205 = scmp.le.s32.totalorder 1, %s17
      %p206 = scmp.lt.s32.totalorder %s17, 3
      %p207 = pnand %p205, %p206
      %p208 = pneg %p207
      // Predicated region
      $region37: #{tpu_custom_call.1} parent=5 // pred_check
        _
      $region38: #{tpu_custom_call.1} parent=5 // pred_check_branch
        %210 = sbr.rel (%p207) target = $region40
      $region39: #{tpu_custom_call.1} parent=5 // pred_region
        %s211 = ssub.s32 %s17, 1
        %s212 = sand.u32 %s30, 1
        %s213 = scalar_lea.sflag [#allocation3], %s212
        %s214 = sand.u32 %s30, 1
        %s215 = smul.addr %s214, 64
        %s216 = scalar_lea.vmem [#allocation2], %s215
        // Predicated region
        $region41: #{tpu_custom_call.1} parent=39 // pred_check
          %p217 = pneg %p43
        $region42: #{tpu_custom_call.1} parent=39 // pred_check_branch
          %219 = sbr.rel (%p217) target = $region44
        $region43: #{tpu_custom_call.1} parent=39 // pred_region
          %220 = dma.done %s213, 1024
        $region44: #{tpu_custom_call.1} parent=39 // pred_fallthru
          _
        %s221 = sand.u32 %s30, 1
        %s222 = scalar_lea.sflag [#allocation3], %s221
        %s223 = sand.u32 %s30, 1
        %s224 = smul.addr %s223, 64
        %s225 = scalar_lea.vmem [#allocation2], %s224
        %p226 = pneg %p43
        %p227 = pneg %p40
        %p228 = pneg %p64
        %p229 = pneg %p61
        %p230 = pneg %p85
        %p231 = pneg %p82
        %p232 = pneg %p106
        %p233 = pneg %p103
        %p234 = pneg %p127
        %p235 = pneg %p124
        %p236 = pneg %p153
        %p237 = pneg %p150
        %s238 = sand.u32 %s140, 1
        %s239 = scalar_lea.sflag [#allocation4], %s238
        %s240 = sand.u32 %s140, 1
        %s241 = smul.addr %s240, 64
        %s242 = scalar_lea.vmem [#allocation5], %s241
        %v243 = vld [vmem:[%s216] sm:$0xff]
        %v244 = vld [vmem:[%s216 + $0x8] sm:$0xff]
        %v245 = vld [vmem:[%s216 + $0x10] sm:$0xff]
        %v246 = vld [vmem:[%s216 + $0x18] sm:$0xff]
        %v247 = vld [vmem:[%s216 + $0x20] sm:$0xff]
        %v248 = vld [vmem:[%s216 + $0x28] sm:$0xff]
        %v249 = vld [vmem:[%s216 + $0x30] sm:$0xff]
        %v250 = vld [vmem:[%s216 + $0x38] sm:$0xff]
        %v251 = vadd.f32 %v243, %v244
        %252 = vadd.xlane.f32.xlu0 %v251
        %v253 = vpop.xlane.xlu0 %252
        %v254 = vadd.f32 %v245, %v246
        %255 = vadd.xlane.f32.xlu0 %v254
        %v256 = vpop.xlane.xlu0 %255
        %v257 = vadd.f32 %v247, %v248
        %258 = vadd.xlane.f32.xlu0 %v257
        %v259 = vpop.xlane.xlu0 %258
        %v260 = vadd.f32 %v249, %v250
        %261 = vadd.xlane.f32.xlu0 %v260
        %v262 = vpop.xlane.xlu0 %261
        %v263 = vmul.f32 %v253, 0.00390625
        %v264 = vmul.f32 %v256, 0.00390625
        %v265 = vmul.f32 %v259, 0.00390625
        %v266 = vmul.f32 %v262, 0.00390625
        %v267 = vmax.f32 %v243, %v244
        %268 = vmax.xlane.f32.xlu0 %v267
        %v269 = vpop.xlane.xlu0 %268
        %v270 = vmax.f32 %v245, %v246
        %271 = vmax.xlane.f32.xlu0 %v270
        %v272 = vpop.xlane.xlu0 %271
        %v273 = vmax.f32 %v247, %v248
        %274 = vmax.xlane.f32.xlu0 %v273
        %v275 = vpop.xlane.xlu0 %274
        %v276 = vmax.f32 %v249, %v250
        %277 = vmax.xlane.f32.xlu0 %v276
        %v278 = vpop.xlane.xlu0 %277
        %vm279 = vcmask 7168
        %v280 = vsel %vm279, %v263, %v269
        %v281 = vsel %vm279, %v264, %v272
        %v282 = vsel %vm279, %v265, %v275
        %v283 = vsel %vm279, %v266, %v278
        %v284 = vld [vmem:[%s1] sm:$0x3]
        %v285 = vld [vmem:[%s2] sm:$0x3]
        %287 = vset.pattern.permute.xlu0 0
        %288 = vperm.xlu0 %287, %v285
        %v289 = vpop.permute.xlu0 %288
        %vm291 = vcmask 261120
        %v293 = vsel %vm291, %v284, 0
        %295 = vmatprep.subr.mxu0 0.0
        %296 = vmatpush1.msra.mxu0 %v280
        %297 = vmatprep.subr.mxu0 0.0
        %298 = vmatpush1.msra.mxu0 %v281
        %299 = vmatprep.subr.mxu0 0.0
        %300 = vmatpush1.msra.mxu0 %v282
        %301 = vmatprep.subr.mxu0 0.0
        %302 = vmatpush1.msra.mxu0 %v283
        %303 = vmatprep.subr.mxu0 0.0
        %304 = vmatpush1.msra.mxu0 0.0
        %305 = vmatprep.subr.mxu0 0.0
        %306 = vmatpush1.msra.mxu0 0.0
        %307 = vmatprep.subr.mxu0 0.0
        %308 = vmatpush1.msra.mxu0 0.0
        %309 = vmatprep.subr.mxu0 0.0
        %310 = vmatpush1.msra.mxu0 0.0
        %311 = vmatprep.subr.mxu0 0.0
        %312 = vmatpush1.msra.mxu0 0.0
        %313 = vmatprep.subr.mxu0 0.0
        %314 = vmatpush1.msra.mxu0 0.0
        %315 = vmatprep.subr.mxu0 0.0
        %316 = vmatpush1.msra.mxu0 0.0
        %317 = vmatprep.subr.mxu0 0.0
        %318 = vmatpush1.msra.mxu0 0.0
        %319 = vmatprep.subr.mxu0 0.0
        %320 = vmatpush1.msra.mxu0 0.0
        %321 = vmatprep.subr.mxu0 0.0
        %322 = vmatpush1.msra.mxu0 0.0
        %323 = vmatprep.subr.mxu0 0.0
        %324 = vmatpush1.msra.mxu0 0.0
        %325 = vmatprep.subr.mxu0 0.0
        %326 = vmatpush1.msra.mxu0 0.0
        %327 = vmatprep.subr.mxu0 0.0
        %328 = vmatpush1.msra.mxu0 0.0
        %329 = vmatprep.subr.mxu0 0.0
        %330 = vmatpush1.msra.mxu0 0.0
        %331 = vmatprep.subr.mxu0 0.0
        %332 = vmatpush1.msra.mxu0 0.0
        %333 = vmatprep.subr.mxu0 0.0
        %334 = vmatpush1.msra.mxu0 0.0
        %335 = vmatprep.subr.mxu0 0.0
        %336 = vmatpush1.msra.mxu0 0.0
        %337 = vmatprep.subr.mxu0 0.0
        %338 = vmatpush1.msra.mxu0 0.0
        %339 = vmatprep.subr.mxu0 0.0
        %340 = vmatpush1.msra.mxu0 0.0
        %341 = vmatprep.subr.mxu0 0.0
        %342 = vmatpush1.msra.mxu0 0.0
        %343 = vmatprep.subr.mxu0 0.0
        %344 = vmatpush1.msra.mxu0 0.0
        %345 = vmatprep.subr.mxu0 0.0
        %346 = vmatpush1.msra.mxu0 0.0
        %347 = vmatprep.subr.mxu0 0.0
        %348 = vmatpush1.msra.mxu0 0.0
        %349 = vmatprep.subr.mxu0 0.0
        %350 = vmatpush1.msra.mxu0 0.0
        %351 = vmatprep.subr.mxu0 0.0
        %352 = vmatpush1.msra.mxu0 0.0
        %353 = vmatprep.subr.mxu0 0.0
        %354 = vmatpush1.msra.mxu0 0.0
        %355 = vmatprep.subr.mxu0 0.0
        %356 = vmatpush1.msra.mxu0 0.0
        %357 = vmatprep.subr.mxu0 0.0
        %358 = vmatpush1.msra.mxu0 0.0
        %359 = vmatprep.mubr.f32.mxu0 0.0
        %360 = vmatmul.mubr.f32.gmra.mrb[0].mxu0 %v293
        %v361 = vpop.f32.mrb[0].mxu0
        %v362 = vadd.f32 %v289, %v361
        %v363 = vpop.f32.mrb[0].mxu0
        %364 = vdwg.mxu0
        %v365 = vmax.f32 %v362, 0.0
        %v366 = vld [vmem:[%s3] sm:$0xff]
        %v367 = vld [vmem:[%s3 + $0x8] sm:$0xff]
        %v368 = vld [vmem:[%s3 + $0x10] sm:$0xff]
        %v369 = vld [vmem:[%s3 + $0x18] sm:$0xff]
        %v370 = vld [vmem:[%s4] sm:$0xff]
        %v371 = vld [vmem:[%s4 + $0x8] sm:$0xff]
        %v372 = vld [vmem:[%s4 + $0x10] sm:$0xff]
        %v373 = vld [vmem:[%s4 + $0x18] sm:$0xff]
        %375 = vset.pattern.permute.xlu0 0
        %376 = vperm.xlu0 %375, %v370
        %v377 = vpop.permute.xlu0 %376
        %380 = vset.pattern.permute.xlu0 0
        %381 = vperm.xlu0 %380, %v371
        %v382 = vpop.permute.xlu0 %381
        %385 = vset.pattern.permute.xlu0 0
        %386 = vperm.xlu0 %385, %v372
        %v387 = vpop.permute.xlu0 %386
        %390 = vset.pattern.permute.xlu0 0
        %391 = vperm.xlu0 %390, %v373
        %v392 = vpop.permute.xlu0 %391
        %vm394 = vcmask 15360
        %v396 = vsel %vm394, %v366, 0
        %v399 = vsel %vm394, %v367, 0
        %v402 = vsel %vm394, %v368, 0
        %v405 = vsel %vm394, %v369, 0
        %vm407 = vcmask 1041408
        %v409 = vsel %vm407, %v365, 0
        %411 = vmatprep.subr.mxu0 0.0
        %412 = vmatpush1.msra.mxu0 %v409
        %413 = vmatprep.subr.mxu0 0.0
        %414 = vmatpush1.msra.mxu0 0.0
        %415 = vmatprep.subr.mxu0 0.0
        %416 = vmatpush1.msra.mxu0 0.0
        %417 = vmatprep.subr.mxu0 0.0
        %418 = vmatpush1.msra.mxu0 0.0
        %419 = vmatprep.subr.mxu0 0.0
        %420 = vmatpush1.msra.mxu0 0.0
        %421 = vmatprep.subr.mxu0 0.0
        %422 = vmatpush1.msra.mxu0 0.0
        %423 = vmatprep.subr.mxu0 0.0
        %424 = vmatpush1.msra.mxu0 0.0
        %425 = vmatprep.subr.mxu0 0.0
        %426 = vmatpush1.msra.mxu0 0.0
        %427 = vmatprep.subr.mxu0 0.0
        %428 = vmatpush1.msra.mxu0 0.0
        %429 = vmatprep.subr.mxu0 0.0
        %430 = vmatpush1.msra.mxu0 0.0
        %431 = vmatprep.subr.mxu0 0.0
        %432 = vmatpush1.msra.mxu0 0.0
        %433 = vmatprep.subr.mxu0 0.0
        %434 = vmatpush1.msra.mxu0 0.0
        %435 = vmatprep.subr.mxu0 0.0
        %436 = vmatpush1.msra.mxu0 0.0
        %437 = vmatprep.subr.mxu0 0.0
        %438 = vmatpush1.msra.mxu0 0.0
        %439 = vmatprep.subr.mxu0 0.0
        %440 = vmatpush1.msra.mxu0 0.0
        %441 = vmatprep.subr.mxu0 0.0
        %442 = vmatpush1.msra.mxu0 0.0
        %443 = vmatprep.subr.mxu0 0.0
        %444 = vmatpush1.msra.mxu0 0.0
        %445 = vmatprep.subr.mxu0 0.0
        %446 = vmatpush1.msra.mxu0 0.0
        %447 = vmatprep.subr.mxu0 0.0
        %448 = vmatpush1.msra.mxu0 0.0
        %449 = vmatprep.subr.mxu0 0.0
        %450 = vmatpush1.msra.mxu0 0.0
        %451 = vmatprep.subr.mxu0 0.0
        %452 = vmatpush1.msra.mxu0 0.0
        %453 = vmatprep.subr.mxu0 0.0
        %454 = vmatpush1.msra.mxu0 0.0
        %455 = vmatprep.subr.mxu0 0.0
        %456 = vmatpush1.msra.mxu0 0.0
        %457 = vmatprep.subr.mxu0 0.0
        %458 = vmatpush1.msra.mxu0 0.0
        %459 = vmatprep.subr.mxu0 0.0
        %460 = vmatpush1.msra.mxu0 0.0
        %461 = vmatprep.subr.mxu0 0.0
        %462 = vmatpush1.msra.mxu0 0.0
        %463 = vmatprep.subr.mxu0 0.0
        %464 = vmatpush1.msra.mxu0 0.0
        %465 = vmatprep.subr.mxu0 0.0
        %466 = vmatpush1.msra.mxu0 0.0
        %467 = vmatprep.subr.mxu0 0.0
        %468 = vmatpush1.msra.mxu0 0.0
        %469 = vmatprep.subr.mxu0 0.0
        %470 = vmatpush1.msra.mxu0 0.0
        %471 = vmatprep.subr.mxu0 0.0
        %472 = vmatpush1.msra.mxu0 0.0
        %473 = vmatprep.subr.mxu0 0.0
        %474 = vmatpush1.msra.mxu0 0.0
        %475 = vmatprep.mubr.f32.mxu0 0.0
        %476 = vmatmul.mubr.f32.gmra.mrb[0].mxu0 %v396
        %v477 = vpop.f32.mrb[0].mxu0
        %v478 = vadd.f32 %v377, %v477
        %v479 = vpop.f32.mrb[0].mxu0
        %480 = vmatprep.mubr.f32.mxu0 0.0
        %481 = vmatmul.mubr.f32.gmra.mrb[0].mxu0 %v399
        %v482 = vpop.f32.mrb[0].mxu0
        %v483 = vadd.f32 %v382, %v482
        %v484 = vpop.f32.mrb[0].mxu0
        %485 = vmatprep.mubr.f32.mxu0 0.0
        %486 = vmatmul.mubr.f32.gmra.mrb[0].mxu0 %v402
        %v487 = vpop.f32.mrb[0].mxu0
        %v488 = vadd.f32 %v387, %v487
        %v489 = vpop.f32.mrb[0].mxu0
        %490 = vmatprep.mubr.f32.mxu0 0.0
        %491 = vmatmul.mubr.f32.gmra.mrb[0].mxu0 %v405
        %v492 = vpop.f32.mrb[0].mxu0
        %v493 = vadd.f32 %v392, %v492
        %v494 = vpop.f32.mrb[0].mxu0
        %495 = vdwg.mxu0
        %500 = vrot.lane.b32.xlu0 %v478, 127
        %v501 = vpop.permute.xlu0 %500
        %502 = vrot.lane.b32.xlu0 %v483, 127
        %v503 = vpop.permute.xlu0 %502
        %504 = vrot.lane.b32.xlu0 %v488, 127
        %v505 = vpop.permute.xlu0 %504
        %506 = vrot.lane.b32.xlu0 %v493, 127
        %v507 = vpop.permute.xlu0 %506
        %v512 = vadd.f32 %v478, %v501
        %v513 = vadd.f32 %v483, %v503
        %v514 = vadd.f32 %v488, %v505
        %v515 = vadd.f32 %v493, %v507
        %v516 = vxor.u32 %v512, 2147483648
        %v517 = vxor.u32 %v513, 2147483648
        %v518 = vxor.u32 %v514, 2147483648
        %v519 = vxor.u32 %v515, 2147483648
        %v520 = vmul.f32 %v516, 1.442695
        %v521 = vpow.pop %v520
        %v522 = vmul.f32 %v517, 1.442695
        %v523 = vpow.pop %v522
        %v524 = vmul.f32 %v518, 1.442695
        %v525 = vpow.pop %v524
        %v526 = vmul.f32 %v519, 1.442695
        %v527 = vpow.pop %v526
        %v528 = vadd.f32 %v521, 1.0
        %v529 = vadd.f32 %v523, 1.0
        %v530 = vadd.f32 %v525, 1.0
        %v531 = vadd.f32 %v527, 1.0
        %v532 = vrcp.pop %v528
        %v533 = vmul.f32 1.0, %v532
        %v534 = vrcp.pop %v529
        %v535 = vmul.f32 1.0, %v534
        %v536 = vrcp.pop %v530
        %v537 = vmul.f32 1.0, %v536
        %v538 = vrcp.pop %v531
        %v539 = vmul.f32 1.0, %v538
        %541 = vset.pattern.permute.xlu0 0
        %542 = vperm.xlu0 %541, %v533
        %v543 = vpop.permute.xlu0 %542
        %546 = vset.pattern.permute.xlu0 0
        %547 = vperm.xlu0 %546, %v535
        %v548 = vpop.permute.xlu0 %547
        %551 = vset.pattern.permute.xlu0 0
        %552 = vperm.xlu0 %551, %v537
        %v553 = vpop.permute.xlu0 %552
        %556 = vset.pattern.permute.xlu0 0
        %557 = vperm.xlu0 %556, %v539
        %v558 = vpop.permute.xlu0 %557
        %v560 = vmul.f32 %v243, %v543
        %v561 = vmul.f32 %v244, %v543
        %v562 = vmul.f32 %v245, %v548
        %v563 = vmul.f32 %v246, %v548
        %v564 = vmul.f32 %v247, %v553
        %v565 = vmul.f32 %v248, %v553
        %v566 = vmul.f32 %v249, %v558
        %v567 = vmul.f32 %v250, %v558
        %568 = vst [vmem:[%s242] sm:$0xff] %v560
        %569 = vst [vmem:[%s242 + $0x8] sm:$0xff] %v561
        %570 = vst [vmem:[%s242 + $0x10] sm:$0xff] %v562
        %571 = vst [vmem:[%s242 + $0x18] sm:$0xff] %v563
        %572 = vst [vmem:[%s242 + $0x20] sm:$0xff] %v564
        %573 = vst [vmem:[%s242 + $0x28] sm:$0xff] %v565
        %574 = vst [vmem:[%s242 + $0x30] sm:$0xff] %v566
        %575 = vst [vmem:[%s242 + $0x38] sm:$0xff] %v567
        %s576 = sand.u32 %s140, 1
        %s577 = scalar_lea.sflag [#allocation4], %s576
        %s578 = sand.u32 %s140, 1
        %s579 = smul.addr %s578, 64
        %s580 = scalar_lea.vmem [#allocation5], %s579
        // Predicated region
        $region45: #{tpu_custom_call.1} parent=39 // pred_check
          %p581 = pneg %p150
        $region46: #{tpu_custom_call.1} parent=39 // pred_check_branch
          %583 = sbr.rel (%p581) target = $region48
        $region47: #{tpu_custom_call.1} parent=39 // pred_region
          %s585 = ssub.s32 1024, 1024
          %586 = vsyncadd %s577, %s585
          %s587 = smul.addr %s22, 8
          %s588 = smul.addr %s587, 128
          %s589 = scalar_lea.hbm %s5, %s588
          %s590 = sshll.u32 %s580, 4
          %s591 = int_to_ptr.vmem [resolvable:$true] %s590
          %596 = dma.vmem_to_hbm [thread:$0]  %s591, 1024, %s589, %s577, 256, 256, 16
        $region48: #{tpu_custom_call.1} parent=39 // pred_fallthru
          _
      $region40: #{tpu_custom_call.1} parent=5 // pred_fallthru
        _
      %p597 = scmp.le.s32.totalorder 2, %s17
      // Predicated region
      $region49: #{tpu_custom_call.1} parent=5 // pred_check
        %p598 = pneg %p597
      $region50: #{tpu_custom_call.1} parent=5 // pred_check_branch
        %600 = sbr.rel (%p598) target = $region52
      $region51: #{tpu_custom_call.1} parent=5 // pred_region
        %s601 = ssub.s32 %s17, 2
        // Predicated region
        $region53: #{tpu_custom_call.1} parent=51 // pred_check
          %p602 = pneg %p156
        $region54: #{tpu_custom_call.1} parent=51 // pred_check_branch
          %604 = sbr.rel (%p602) target = $region56
        $region55: #{tpu_custom_call.1} parent=51 // pred_region
          %s605 = sand.u32 %s141, 1
          %s606 = scalar_lea.sflag [#allocation4], %s605
          %s607 = sand.u32 %s141, 1
          %s608 = smul.addr %s607, 64
          %s609 = scalar_lea.vmem [#allocation5], %s608
          %610 = dma.done %s606, 1024
        $region56: #{tpu_custom_call.1} parent=51 // pred_fallthru
          _
      $region52: #{tpu_custom_call.1} parent=5 // pred_fallthru
        _
    $region6: #{tpu_custom_call.1} parent=1 // loop_footer
      %s21 = sadd.s32 1, %s17
    $region7: #{tpu_custom_call.1} parent=1 // loop_footer_branch
      %16 = sbr.rel target = $region3
    $region8: #{tpu_custom_call.1} parent=1 // loop_exit
      _
    %611 = vsyncpa [#allocation3], 1
    %s612 = scalar_lea.sflag [#allocation3], 1
    %613 = vsyncpa %s612, 1
    %614 = vsyncpa [#allocation4], 1
    %s615 = scalar_lea.sflag [#allocation4], 1
    %616 = vsyncpa %s615, 1

</llo_original>
